<compile_context>
chip_gen: v7x
topology: tpu7x:2x2x1
jax: 0.10.0
libtpu: 0.0.40
codegen_flags: <defaults>
</compile_context>

<pallas_src>
import functools

import jax
import jax.numpy as jnp
from jax.experimental import pallas as pl
from jax.experimental.pallas import tpu as pltpu


# ----------------------------------------------------------------------------
# Fused Pallas kernel: whole forward pass on resident VMEM weights (bf16),
# f32 elementwise math, f32 MXU accumulation.
# ----------------------------------------------------------------------------
def _fused_forward_kernel(x_ref, m1_ref, m2_ref, m3_ref, w4_ref, w5_ref, b_ref,
                          o_ref):
    bf16 = jnp.bfloat16
    f32 = jnp.float32
    n1 = m1_ref.shape[1]
    n2 = m2_ref.shape[1]
    n3 = m3_ref.shape[1]
    n4 = w4_ref.shape[1]
    n5 = w5_ref.shape[1]

    h = x_ref[...]                                                    # (tm, C*W) f32
    # conv1 (as dense) + ReLU
    h = jnp.dot(h.astype(bf16), m1_ref[...], preferred_element_type=f32)
    h = jnp.maximum(h + b_ref[0:1, :n1], 0.0)
    # conv2 (as dense) + ReLU
    h = jnp.dot(h.astype(bf16), m2_ref[...], preferred_element_type=f32)
    h = jnp.maximum(h + b_ref[1:2, :n2], 0.0)
    # conv3 (as dense) + ReLU (output already in flattened (Cout*Wout) layout)
    h = jnp.dot(h.astype(bf16), m3_ref[...], preferred_element_type=f32)
    h = jnp.maximum(h + b_ref[2:3, :n3], 0.0)
    # noisy fc1 + ReLU
    h = jnp.dot(h.astype(bf16), w4_ref[...], preferred_element_type=f32)
    h = jnp.maximum(h + b_ref[3:4, :n4], 0.0)
    # noisy fc2 + Tanh (output columns padded to 128 lanes -> full-lane store)
    h = jnp.dot(h.astype(bf16), w5_ref[...], preferred_element_type=f32)
    o_ref[...] = jnp.tanh(h + b_ref[4:5, :n5])


def _fused_forward(x, m1, m2, m3, w4, w5, bias, tm):
    mp, kin = x.shape
    n_pad = w5.shape[1]
    grid = (mp // tm,)
    in_specs = [
        pl.BlockSpec((tm, kin), lambda i: (i, 0)),
        # resident weight blocks: same block every grid step -> DMA'd once
        pl.BlockSpec(m1.shape, lambda i: (0, 0)),
        pl.BlockSpec(m2.shape, lambda i: (0, 0)),
        pl.BlockSpec(m3.shape, lambda i: (0, 0)),
        pl.BlockSpec(w4.shape, lambda i: (0, 0)),
        pl.BlockSpec(w5.shape, lambda i: (0, 0)),
        pl.BlockSpec(bias.shape, lambda i: (0, 0)),
    ]
    return pl.pallas_call(
        _fused_forward_kernel,
        out_shape=jax.ShapeDtypeStruct((mp, n_pad), jnp.float32),
        grid=grid,
        in_specs=in_specs,
        out_specs=pl.BlockSpec((tm, n_pad), lambda i: (i, 0)),
        compiler_params=pltpu.CompilerParams(
            dimension_semantics=("parallel",)),
    )(x, m1, m2, m3, w4, w5, bias)


# ----------------------------------------------------------------------------
# One-time weight preparation (hoisted out of forward)
# ----------------------------------------------------------------------------
def conv_to_dense(w, b, w_in, stride=2, pad=1):
    """Express Conv1d(w,b,stride,pad) as a dense matmul on the flattened (C*W) vector.

    Returns M of shape (Cin*Win, Cout*Wout) and bias row (1, Cout*Wout) such that
    flat_out = flat_in @ M + bias, with flat layout index = channel*W + position
    (identical to PyTorch NCW flatten order)."""
    cout, cin, k = w.shape
    w_out = (w_in + 2 * pad - k) // stride + 1
    iw = jnp.arange(w_in)
    oo = jnp.arange(w_out)
    tap = iw[:, None] - (oo[None, :] * stride - pad)          # (Win, Wout) tap index
    valid = (tap >= 0) & (tap < k)
    tap_safe = jnp.clip(tap, 0, k - 1)
    w_g = w[:, :, tap_safe]                                   # (Cout, Cin, Win, Wout)
    w_g = jnp.where(valid[None, None, :, :], w_g, 0.0)
    m = jnp.transpose(w_g, (1, 2, 0, 3)).reshape(cin * w_in, cout * w_out)
    b_t = jnp.repeat(b, w_out).reshape(1, cout * w_out)
    return m.astype(jnp.float32), b_t.astype(jnp.float32)


def prepare_weights(p, input_shape):
    """Precompute all matmul-layout weights once (re-run after eps resample)."""
    _, w0 = input_shape
    w1out = (w0 + 2 - 3) // 2 + 1
    w2out = (w1out + 2 - 3) // 2 + 1

    m1, b1 = conv_to_dense(p["w1"], p["b1"], w0)
    m2, b2 = conv_to_dense(p["w2"], p["b2"], w1out)
    m3, b3 = conv_to_dense(p["w3"], p["b3"], w2out)

    # NoisyLinearFull effective weights = W + sigma*eps (deterministic eps draw).
    # TODO(synk): PyTorch resamples eps per forward in training mode; here eps is a
    # fixed draw -> re-run prepare_weights() after resampling eps to refresh these.
    w4 = (p["fc1_w"] + p["fc1_sw"] * p["fc1_ew"]).T.astype(jnp.float32)  # (fc, hid)
    b4 = (p["fc1_b"] + p["fc1_sb"] * p["fc1_eb"]).reshape(1, -1).astype(jnp.float32)
    w5 = (p["fc2_w"] + p["fc2_sw"] * p["fc2_ew"]).T.astype(jnp.float32)  # (hid, out)
    b5 = (p["fc2_b"] + p["fc2_sb"] * p["fc2_eb"]).reshape(1, -1).astype(jnp.float32)

    # pad final output columns to a full 128-lane slab (lane-dense store)
    outputs = w5.shape[1]
    n_pad = ((outputs + 127) // 128) * 128
    w5p = jnp.zeros((w5.shape[0], n_pad), jnp.float32).at[:, :outputs].set(w5)
    b5p = jnp.zeros((1, n_pad), jnp.float32).at[:, :outputs].set(b5)

    # pack all 5 bias rows into one (8, Nmax) f32 array (fewer kernel inputs/DMAs)
    n_sizes = [m1.shape[1], m2.shape[1], m3.shape[1], w4.shape[1], n_pad]
    n_max = max(n_sizes)
    bias = jnp.zeros((8, n_max), jnp.float32)
    for r, (bb, nn) in enumerate(zip([b1, b2, b3, b4, b5p], n_sizes)):
        bias = bias.at[r, :nn].set(bb[0])

    # bf16 weights for the native MXU path (halves weight DMA bytes too)
    return {
        "m1": m1.astype(jnp.bfloat16),
        "m2": m2.astype(jnp.bfloat16),
        "m3": m3.astype(jnp.bfloat16),
        "w4": w4.astype(jnp.bfloat16),
        "w5": w5p.astype(jnp.bfloat16),
        "bias": bias,
    }


# ----------------------------------------------------------------------------
# Forward pass (single fused kernel; glue is just flatten + row pad + slice)
# ----------------------------------------------------------------------------
@functools.partial(jax.jit, static_argnums=(2,))
def forward(prep, state, outputs_count):
    """state: (N, channels, width) float32 -> (N, outputs_count)."""
    n, c, w = state.shape
    x = state.reshape(n, c * w).astype(jnp.float32)

    # batch-row tiling: pad to 8 sublanes; beyond 128 rows use 128-row tiles so the
    # "parallel" grid axis can span both v7x TensorCores and bound activation VMEM.
    mp = ((n + 7) // 8) * 8
    if mp <= 128:
        tm = mp
    else:
        tm = 128
        mp = ((n + 127) // 128) * 128
    if mp != n:
        x = jnp.pad(x, ((0, mp - n), (0, 0)))

    out = _fused_forward(x, prep["m1"], prep["m2"], prep["m3"],
                         prep["w4"], prep["w5"], prep["bias"], tm)
    return out[:n, :outputs_count]


# ----------------------------------------------------------------------------
# Parameter init (deterministic, matches shapes of the PyTorch module)
# ----------------------------------------------------------------------------
def xavier_uniform(key, shape, fan_in, fan_out):
    bound = jnp.sqrt(6.0 / (fan_in + fan_out))
    return jax.random.uniform(key, shape, jnp.float32, -bound, bound)


def make_params(input_shape, outputs_count, kernels_count=32, hidden_count=256,
                sigma=0.1, seed=0):
    channels, width = input_shape
    fc_count = kernels_count * width // 8
    keys = jax.random.split(jax.random.PRNGKey(seed), 20)
    p = {}
    p["w1"] = xavier_uniform(keys[0], (kernels_count, channels, 3),
                             channels * 3, kernels_count * 3)
    p["b1"] = jax.random.uniform(keys[1], (kernels_count,), jnp.float32,
                                 -1.0 / jnp.sqrt(channels * 3.0),
                                 1.0 / jnp.sqrt(channels * 3.0))
    p["w2"] = xavier_uniform(keys[2], (kernels_count, kernels_count, 3),
                             kernels_count * 3, kernels_count * 3)
    p["b2"] = jax.random.uniform(keys[3], (kernels_count,), jnp.float32,
                                 -1.0 / jnp.sqrt(kernels_count * 3.0),
                                 1.0 / jnp.sqrt(kernels_count * 3.0))
    p["w3"] = xavier_uniform(keys[4], (kernels_count, kernels_count, 3),
                             kernels_count * 3, kernels_count * 3)
    p["b3"] = jax.random.uniform(keys[5], (kernels_count,), jnp.float32,
                                 -1.0 / jnp.sqrt(kernels_count * 3.0),
                                 1.0 / jnp.sqrt(kernels_count * 3.0))
    p["fc1_w"] = xavier_uniform(keys[6], (hidden_count, fc_count),
                                fc_count, hidden_count)
    p["fc1_b"] = jnp.zeros((hidden_count,), jnp.float32)
    p["fc1_sw"] = jnp.full((hidden_count, fc_count), sigma, jnp.float32)
    p["fc1_sb"] = jnp.full((hidden_count,), sigma, jnp.float32)
    p["fc1_ew"] = jax.random.normal(keys[7], (hidden_count, fc_count), jnp.float32)
    p["fc1_eb"] = jax.random.normal(keys[8], (hidden_count,), jnp.float32)
    p["fc2_w"] = jax.random.uniform(keys[9], (outputs_count, hidden_count),
                                    jnp.float32, -0.3, 0.3)
    p["fc2_b"] = jnp.zeros((outputs_count,), jnp.float32)
    p["fc2_sw"] = jnp.full((outputs_count, hidden_count), sigma, jnp.float32)
    p["fc2_sb"] = jnp.full((outputs_count,), sigma, jnp.float32)
    p["fc2_ew"] = jax.random.normal(keys[10], (outputs_count, hidden_count),
                                    jnp.float32)
    p["fc2_eb"] = jax.random.normal(keys[11], (outputs_count,), jnp.float32)
    return p


# ----------------------------------------------------------------------------
# Pure-JAX f32 reference (for in-script validation of the fused bf16 kernel)
# ----------------------------------------------------------------------------
def _ref_conv1d(x, w, b, stride=2, pad=1):
    y = jax.lax.conv_general_dilated(
        x, w, window_strides=(stride,), padding=[(pad, pad)],
        dimension_numbers=("NCH", "OIH", "NCH"))
    return y + b[None, :, None]


def reference_forward(p, state):
    x = jnp.maximum(_ref_conv1d(state, p["w1"], p["b1"]), 0.0)
    x = jnp.maximum(_ref_conv1d(x, p["w2"], p["b2"]), 0.0)
    x = jnp.maximum(_ref_conv1d(x, p["w3"], p["b3"]), 0.0)
    x = x.reshape(x.shape[0], -1)
    w1 = p["fc1_w"] + p["fc1_sw"] * p["fc1_ew"]
    b1 = p["fc1_b"] + p["fc1_sb"] * p["fc1_eb"]
    x = jnp.maximum(x @ w1.T + b1, 0.0)
    w2 = p["fc2_w"] + p["fc2_sw"] * p["fc2_ew"]
    b2 = p["fc2_b"] + p["fc2_sb"] * p["fc2_eb"]
    return jnp.tanh(x @ w2.T + b2)


if __name__ == "__main__":
    # Small, module-consistent shapes: channels=4, width=32 (divisible by 8),
    # batch=2, outputs=8, kernels_count=32, hidden=256.
    input_shape = (4, 32)
    outputs_count = 8
    batch = 2

    params = make_params(input_shape, outputs_count)
    prep = prepare_weights(params, input_shape)

    key = jax.random.PRNGKey(0)
    state = jax.random.normal(key, (batch,) + input_shape, jnp.float32)

    out = forward(prep, state, outputs_count)
    out = jax.block_until_ready(out)

    ref = jax.block_until_ready(reference_forward(params, state))

    assert out.shape == (batch, outputs_count)
    assert bool(jnp.all(jnp.isfinite(out)))
    assert bool(jnp.all(jnp.abs(out) <= 1.0))                 # tanh output range
    # bf16 matmul operands -> loosened tolerance vs the f32 reference
    assert bool(jnp.allclose(out, ref, atol=3e-2, rtol=3e-2))
    print("KERNEL_OK")
</pallas_src>

<mosaic_0001>
module attributes {stable_mosaic.version = 11 : i64} {
  func.func @_fused_forward_kernel(%arg0: i32, %arg1: memref<8x128xf32, #tpu.memory_space<vmem>>, %arg2: memref<128x512xbf16, #tpu.memory_space<vmem>>, %arg3: memref<512x256xbf16, #tpu.memory_space<vmem>>, %arg4: memref<256x128xbf16, #tpu.memory_space<vmem>>, %arg5: memref<128x256xbf16, #tpu.memory_space<vmem>>, %arg6: memref<256x128xbf16, #tpu.memory_space<vmem>>, %arg7: memref<8x512xf32, #tpu.memory_space<vmem>>, %arg8: memref<8x128xf32, #tpu.memory_space<vmem>>) attributes {dimension_semantics = [#tpu.dimension_semantics<parallel>], iteration_bounds = array<i64: 1>, scalar_prefetch = 0 : i64, scratch_operands = 0 : i64, tpu.core_type = #tpu.core_type<tc>, window_params = [{transform_indices = @transform_0, window_bounds = array<i64: 8, 128>}, {pipeline_mode = #tpu.pipeline_mode<synchronous>, transform_indices = @transform_1, window_bounds = array<i64: 128, 512>}, {pipeline_mode = #tpu.pipeline_mode<synchronous>, transform_indices = @transform_2, window_bounds = array<i64: 512, 256>}, {pipeline_mode = #tpu.pipeline_mode<synchronous>, transform_indices = @transform_3, window_bounds = array<i64: 256, 128>}, {pipeline_mode = #tpu.pipeline_mode<synchronous>, transform_indices = @transform_4, window_bounds = array<i64: 128, 256>}, {pipeline_mode = #tpu.pipeline_mode<synchronous>, transform_indices = @transform_5, window_bounds = array<i64: 256, 128>}, {pipeline_mode = #tpu.pipeline_mode<synchronous>, transform_indices = @transform_6, window_bounds = array<i64: 8, 512>}, {transform_indices = @transform_7, window_bounds = array<i64: 8, 128>}]} {
    %c0 = arith.constant 0 : index
    %c0_0 = arith.constant 0 : index
    %0 = vector.load %arg1[%c0, %c0_0] : memref<8x128xf32, #tpu.memory_space<vmem>>, vector<8x128xf32>
    %1 = arith.truncf %0 : vector<8x128xf32> to vector<8x128xbf16>
    %c0_1 = arith.constant 0 : index
    %c0_2 = arith.constant 0 : index
    %2 = vector.load %arg2[%c0_1, %c0_2] : memref<128x512xbf16, #tpu.memory_space<vmem>>, vector<128x512xbf16>
    %cst = arith.constant dense<0.000000e+00> : vector<8x512xf32>
    %3 = tpu.matmul %1, %2, %cst {dimension_numbers = #tpu.dot_dimension_numbers<[1], [0], [0], [1], [0, 0, 1, 1], [], []>} : vector<8x128xbf16>, vector<128x512xbf16>, vector<8x512xf32> -> vector<8x512xf32>
    %c0_3 = arith.constant 0 : index
    %c0_4 = arith.constant 0 : index
    %4 = vector.load %arg7[%c0_3, %c0_4] : memref<8x512xf32, #tpu.memory_space<vmem>>, vector<1x512xf32>
    %5 = vector.broadcast %4 : vector<1x512xf32> to vector<8x512xf32>
    %6 = arith.addf %3, %5 : vector<8x512xf32>
    %cst_5 = arith.constant 0.000000e+00 : f32
    %7 = vector.broadcast %cst_5 : f32 to vector<8x512xf32>
    %8 = arith.maximumf %6, %7 : vector<8x512xf32>
    %9 = arith.truncf %8 : vector<8x512xf32> to vector<8x512xbf16>
    %c0_6 = arith.constant 0 : index
    %c0_7 = arith.constant 0 : index
    %10 = vector.load %arg3[%c0_6, %c0_7] : memref<512x256xbf16, #tpu.memory_space<vmem>>, vector<512x256xbf16>
    %cst_8 = arith.constant dense<0.000000e+00> : vector<8x256xf32>
    %11 = tpu.matmul %9, %10, %cst_8 {dimension_numbers = #tpu.dot_dimension_numbers<[1], [0], [0], [1], [0, 0, 1, 1], [], []>} : vector<8x512xbf16>, vector<512x256xbf16>, vector<8x256xf32> -> vector<8x256xf32>
    %c1 = arith.constant 1 : index
    %c0_9 = arith.constant 0 : index
    %12 = vector.load %arg7[%c1, %c0_9] : memref<8x512xf32, #tpu.memory_space<vmem>>, vector<1x256xf32>
    %13 = vector.broadcast %12 : vector<1x256xf32> to vector<8x256xf32>
    %14 = arith.addf %11, %13 : vector<8x256xf32>
    %cst_10 = arith.constant 0.000000e+00 : f32
    %15 = vector.broadcast %cst_10 : f32 to vector<8x256xf32>
    %16 = arith.maximumf %14, %15 : vector<8x256xf32>
    %17 = arith.truncf %16 : vector<8x256xf32> to vector<8x256xbf16>
    %c0_11 = arith.constant 0 : index
    %c0_12 = arith.constant 0 : index
    %18 = vector.load %arg4[%c0_11, %c0_12] : memref<256x128xbf16, #tpu.memory_space<vmem>>, vector<256x128xbf16>
    %cst_13 = arith.constant dense<0.000000e+00> : vector<8x128xf32>
    %19 = tpu.matmul %17, %18, %cst_13 {dimension_numbers = #tpu.dot_dimension_numbers<[1], [0], [0], [1], [0, 0, 1, 1], [], []>} : vector<8x256xbf16>, vector<256x128xbf16>, vector<8x128xf32> -> vector<8x128xf32>
    %c2 = arith.constant 2 : index
    %c0_14 = arith.constant 0 : index
    %20 = vector.load %arg7[%c2, %c0_14] : memref<8x512xf32, #tpu.memory_space<vmem>>, vector<1x128xf32>
    %21 = vector.broadcast %20 : vector<1x128xf32> to vector<8x128xf32>
    %22 = arith.addf %19, %21 : vector<8x128xf32>
    %cst_15 = arith.constant 0.000000e+00 : f32
    %23 = vector.broadcast %cst_15 : f32 to vector<8x128xf32>
    %24 = arith.maximumf %22, %23 : vector<8x128xf32>
    %25 = arith.truncf %24 : vector<8x128xf32> to vector<8x128xbf16>
    %c0_16 = arith.constant 0 : index
    %c0_17 = arith.constant 0 : index
    %26 = vector.load %arg5[%c0_16, %c0_17] : memref<128x256xbf16, #tpu.memory_space<vmem>>, vector<128x256xbf16>
    %cst_18 = arith.constant dense<0.000000e+00> : vector<8x256xf32>
    %27 = tpu.matmul %25, %26, %cst_18 {dimension_numbers = #tpu.dot_dimension_numbers<[1], [0], [0], [1], [0, 0, 1, 1], [], []>} : vector<8x128xbf16>, vector<128x256xbf16>, vector<8x256xf32> -> vector<8x256xf32>
    %c3 = arith.constant 3 : index
    %c0_19 = arith.constant 0 : index
    %28 = vector.load %arg7[%c3, %c0_19] : memref<8x512xf32, #tpu.memory_space<vmem>>, vector<1x256xf32>
    %29 = vector.broadcast %28 : vector<1x256xf32> to vector<8x256xf32>
    %30 = arith.addf %27, %29 : vector<8x256xf32>
    %cst_20 = arith.constant 0.000000e+00 : f32
    %31 = vector.broadcast %cst_20 : f32 to vector<8x256xf32>
    %32 = arith.maximumf %30, %31 : vector<8x256xf32>
    %33 = arith.truncf %32 : vector<8x256xf32> to vector<8x256xbf16>
    %c0_21 = arith.constant 0 : index
    %c0_22 = arith.constant 0 : index
    %34 = vector.load %arg6[%c0_21, %c0_22] : memref<256x128xbf16, #tpu.memory_space<vmem>>, vector<256x128xbf16>
    %cst_23 = arith.constant dense<0.000000e+00> : vector<8x128xf32>
    %35 = tpu.matmul %33, %34, %cst_23 {dimension_numbers = #tpu.dot_dimension_numbers<[1], [0], [0], [1], [0, 0, 1, 1], [], []>} : vector<8x256xbf16>, vector<256x128xbf16>, vector<8x128xf32> -> vector<8x128xf32>
    %c4 = arith.constant 4 : index
    %c0_24 = arith.constant 0 : index
    %36 = vector.load %arg7[%c4, %c0_24] : memref<8x512xf32, #tpu.memory_space<vmem>>, vector<1x128xf32>
    %37 = vector.broadcast %36 : vector<1x128xf32> to vector<8x128xf32>
    %38 = arith.addf %35, %37 : vector<8x128xf32>
    %39 = math.tanh %38 : vector<8x128xf32>
    %c0_25 = arith.constant 0 : index
    %c0_26 = arith.constant 0 : index
    %40 = vector.load %arg8[%c0_25, %c0_26] : memref<8x128xf32, #tpu.memory_space<vmem>>, vector<8x128xf32>
    tpu.vector_store %arg8[%c0_25, %c0_26], %39 {strides = array<i32>} : memref<8x128xf32, #tpu.memory_space<vmem>>, vector<8x128xf32>,
    return
  }
  func.func @transform_0(%arg0: i32) -> (i32, i32) {
    %c0_i32 = arith.constant 0 : i32
    %c0_i32_0 = arith.constant 0 : i32
    return %arg0, %c0_i32 : i32, i32
  }
  func.func @transform_1(%arg0: i32) -> (i32, i32) {
    %c0_i32 = arith.constant 0 : i32
    %c0_i32_0 = arith.constant 0 : i32
    %c0_i32_1 = arith.constant 0 : i32
    return %c0_i32, %c0_i32_0 : i32, i32
  }
  func.func @transform_2(%arg0: i32) -> (i32, i32) {
    %c0_i32 = arith.constant 0 : i32
    %c0_i32_0 = arith.constant 0 : i32
    %c0_i32_1 = arith.constant 0 : i32
    return %c0_i32, %c0_i32_0 : i32, i32
  }
  func.func @transform_3(%arg0: i32) -> (i32, i32) {
    %c0_i32 = arith.constant 0 : i32
    %c0_i32_0 = arith.constant 0 : i32
    %c0_i32_1 = arith.constant 0 : i32
    return %c0_i32, %c0_i32_0 : i32, i32
  }
  func.func @transform_4(%arg0: i32) -> (i32, i32) {
    %c0_i32 = arith.constant 0 : i32
    %c0_i32_0 = arith.constant 0 : i32
    %c0_i32_1 = arith.constant 0 : i32
    return %c0_i32, %c0_i32_0 : i32, i32
  }
  func.func @transform_5(%arg0: i32) -> (i32, i32) {
    %c0_i32 = arith.constant 0 : i32
    %c0_i32_0 = arith.constant 0 : i32
    %c0_i32_1 = arith.constant 0 : i32
    return %c0_i32, %c0_i32_0 : i32, i32
  }
  func.func @transform_6(%arg0: i32) -> (i32, i32) {
    %c0_i32 = arith.constant 0 : i32
    %c0_i32_0 = arith.constant 0 : i32
    %c0_i32_1 = arith.constant 0 : i32
    return %c0_i32, %c0_i32_0 : i32, i32
  }
  func.func @transform_7(%arg0: i32) -> (i32, i32) {
    %c0_i32 = arith.constant 0 : i32
    %c0_i32_0 = arith.constant 0 : i32
    return %arg0, %c0_i32 : i32, i32
  }
}

</mosaic_0001>

<llo_original>
// kernel: forward.1
$region0: #{forward.1}
  #allocation0 [shape = 'u32[]', space=smem, size = 0x4, offset = 0x4, fixed_abs, tag = 'smem constant byte address 0x4 - core index']
  #allocation1 [shape = 'u32[144,128]{1,0:T(1,128)}', space=vmem, size = 0x12000, scoped, tag = 'internal scratch']
  %s0 = inlined_call_operand.vmem [shape: f32[8,128], index: 0, kind: input, shape index: {}]
  %s1 = inlined_call_operand.hbm [shape: bf16[128,512], index: 1, kind: input, shape index: {}]
  %s2 = inlined_call_operand.hbm [shape: bf16[512,256], index: 2, kind: input, shape index: {}]
  %s3 = inlined_call_operand.hbm [shape: bf16[256,128], index: 3, kind: input, shape index: {}]
  %s4 = inlined_call_operand.hbm [shape: bf16[128,256], index: 4, kind: input, shape index: {}]
  %s5 = inlined_call_operand.hbm [shape: bf16[256,128], index: 5, kind: input, shape index: {}]
  %s6 = inlined_call_operand.hbm [shape: f32[8,512], index: 6, kind: input, shape index: {}]
  %s7 = inlined_call_operand.vmem [shape: f32[8,128], index: 7, kind: output, shape index: {}]
  %s8 = sld [smem:[#allocation0]]
  $region62: #{forward.1} parent=0
    _
  %s10 = ssub.s32 1, %s8
  %s11 = scalar_select 0, %s10, %s8
  $region1: #{forward.1} parent=0
    #allocation2 [shape = 'u8[131072]{0}', space=vmem, size = 0x20000, scoped, tag = 'input window, operand 1, single buffered']
    #allocation3 [shape = 's32[1]{0}', space=sflag, size = 0x4, scoped, tag = 'scoped memory for forward.1']
    #allocation4 [shape = 'u8[262144]{0}', space=vmem, size = 0x40000, scoped, tag = 'input window, operand 2, single buffered']
    #allocation5 [shape = 's32[1]{0}', space=sflag, size = 0x4, scoped, tag = 'scoped memory for forward.1']
    #allocation6 [shape = 'u8[65536]{0}', space=vmem, size = 0x10000, scoped, tag = 'input window, operand 3, single buffered']
    #allocation7 [shape = 'u8[65536]{0}', space=vmem, size = 0x10000, scoped, tag = 'input window, operand 4, single buffered']
    #allocation8 [shape = 's32[1]{0}', space=sflag, size = 0x4, scoped, tag = 'scoped memory for forward.1']
    #allocation9 [shape = 'u8[65536]{0}', space=vmem, size = 0x10000, scoped, tag = 'input window, operand 5, single buffered']
    #allocation10 [shape = 'u8[16384]{0}', space=vmem, size = 0x4000, scoped, tag = 'input window, operand 6, single buffered']
    #allocation11 [shape = 's32[1]{0}', space=sflag, size = 0x4, scoped, tag = 'scoped memory for forward.1']
    %12 = vsyncpa [#allocation3], 0
    %13 = vsyncpa [#allocation5], 0
    %14 = vsyncpa [#allocation8], 0
    %15 = vsyncpa [#allocation11], 0
    // Predicated region
    $region2: #{forward.1} parent=1 // pred_check
      _
    $region3: #{forward.1} parent=1 // pred_check_branch
      %17 = sbr.rel (0) target = $region5
    $region4: #{forward.1} parent=1 // pred_region
      _
    $region5: #{forward.1} parent=1 // pred_fallthru
      _
    // Predicated region
    $region6: #{forward.1} parent=1 // pred_check
      _
    $region7: #{forward.1} parent=1 // pred_check_branch
      %19 = sbr.rel (0) target = $region9
    $region8: #{forward.1} parent=1 // pred_region
      %s21 = ssub.s32 4096, 4096
      %22 = vsyncadd [#allocation3], %s21
      %s23 = sshll.u32 [#allocation2], 4
      %s24 = int_to_ptr.vmem [resolvable:$true] %s23
      %29 = dma.hbm_to_vmem [thread:$0]  %s1, 4096, %s24, [#allocation3], 256, 256, 16
    $region9: #{forward.1} parent=1 // pred_fallthru
      _
    // Predicated region
    $region10: #{forward.1} parent=1 // pred_check
      _
    $region11: #{forward.1} parent=1 // pred_check_branch
      %31 = sbr.rel (0) target = $region13
    $region12: #{forward.1} parent=1 // pred_region
      %s33 = ssub.s32 8192, 8192
      %34 = vsyncadd [#allocation5], %s33
      %s35 = sshll.u32 [#allocation4], 4
      %s36 = int_to_ptr.vmem [resolvable:$true] %s35
      %41 = dma.hbm_to_vmem [thread:$0]  %s2, 8192, %s36, [#allocation5], 128, 128, 8
    $region13: #{forward.1} parent=1 // pred_fallthru
      _
    // Predicated region
    $region14: #{forward.1} parent=1 // pred_check
      _
    $region15: #{forward.1} parent=1 // pred_check_branch
      %43 = sbr.rel (0) target = $region17
    $region16: #{forward.1} parent=1 // pred_region
      %s45 = ssub.s32 2048, 2048
      %46 = vsyncadd [#allocation5], %s45
      %s47 = sshll.u32 [#allocation6], 4
      %s48 = int_to_ptr.vmem [resolvable:$true] %s47
      %53 = dma.hbm_to_vmem [thread:$0]  %s3, 2048, %s48, [#allocation5], 64, 64, 4
    $region17: #{forward.1} parent=1 // pred_fallthru
      _
    // Predicated region
    $region18: #{forward.1} parent=1 // pred_check
      _
    $region19: #{forward.1} parent=1 // pred_check_branch
      %55 = sbr.rel (0) target = $region21
    $region20: #{forward.1} parent=1 // pred_region
      %s57 = ssub.s32 2048, 2048
      %58 = vsyncadd [#allocation8], %s57
      %s59 = sshll.u32 [#allocation7], 4
      %s60 = int_to_ptr.vmem [resolvable:$true] %s59
      %65 = dma.hbm_to_vmem [thread:$0]  %s4, 2048, %s60, [#allocation8], 128, 128, 8
    $region21: #{forward.1} parent=1 // pred_fallthru
      _
    // Predicated region
    $region22: #{forward.1} parent=1 // pred_check
      _
    $region23: #{forward.1} parent=1 // pred_check_branch
      %67 = sbr.rel (0) target = $region25
    $region24: #{forward.1} parent=1 // pred_region
      %s69 = ssub.s32 2048, 2048
      %70 = vsyncadd [#allocation8], %s69
      %s71 = sshll.u32 [#allocation9], 4
      %s72 = int_to_ptr.vmem [resolvable:$true] %s71
      %77 = dma.hbm_to_vmem [thread:$0]  %s5, 2048, %s72, [#allocation8], 64, 64, 4
    $region25: #{forward.1} parent=1 // pred_fallthru
      _
    // Predicated region
    $region26: #{forward.1} parent=1 // pred_check
      _
    $region27: #{forward.1} parent=1 // pred_check_branch
      %79 = sbr.rel (0) target = $region29
    $region28: #{forward.1} parent=1 // pred_region
      %s81 = ssub.s32 512, 512
      %82 = vsyncadd [#allocation11], %s81
      %s84 = sshll.u32 [#allocation10], 4
      %s85 = int_to_ptr.vmem [resolvable:$true] %s84
      %87 = dma.hbm_to_vmem [thread:$0]  %s6, 512, %s85, [#allocation11]
    $region29: #{forward.1} parent=1 // pred_fallthru
      _
    // Predicated region
    $region30: #{forward.1} parent=1 // pred_check
      _
    $region31: #{forward.1} parent=1 // pred_check_branch
      %89 = sbr.rel (0) target = $region33
    $region32: #{forward.1} parent=1 // pred_region
      %90 = dma.done [#allocation3], 4096
    $region33: #{forward.1} parent=1 // pred_fallthru
      _
    // Predicated region
    $region34: #{forward.1} parent=1 // pred_check
      _
    $region35: #{forward.1} parent=1 // pred_check_branch
      %92 = sbr.rel (0) target = $region37
    $region36: #{forward.1} parent=1 // pred_region
      %93 = dma.done [#allocation5], 8192
    $region37: #{forward.1} parent=1 // pred_fallthru
      _
    // Predicated region
    $region38: #{forward.1} parent=1 // pred_check
      _
    $region39: #{forward.1} parent=1 // pred_check_branch
      %95 = sbr.rel (0) target = $region41
    $region40: #{forward.1} parent=1 // pred_region
      %96 = dma.done [#allocation5], 2048
    $region41: #{forward.1} parent=1 // pred_fallthru
      _
    // Predicated region
    $region42: #{forward.1} parent=1 // pred_check
      _
    $region43: #{forward.1} parent=1 // pred_check_branch
      %98 = sbr.rel (0) target = $region45
    $region44: #{forward.1} parent=1 // pred_region
      %99 = dma.done [#allocation8], 2048
    $region45: #{forward.1} parent=1 // pred_fallthru
      _
    // Predicated region
    $region46: #{forward.1} parent=1 // pred_check
      _
    $region47: #{forward.1} parent=1 // pred_check_branch
      %101 = sbr.rel (0) target = $region49
    $region48: #{forward.1} parent=1 // pred_region
      %102 = dma.done [#allocation8], 2048
    $region49: #{forward.1} parent=1 // pred_fallthru
      _
    // Predicated region
    $region50: #{forward.1} parent=1 // pred_check
      _
    $region51: #{forward.1} parent=1 // pred_check_branch
      %104 = sbr.rel (0) target = $region53
    $region52: #{forward.1} parent=1 // pred_region
      %105 = dma.done [#allocation11], 512
    $region53: #{forward.1} parent=1 // pred_fallthru
      _
    %v107 = vld [vmem:[%s0] sm:$0xff]
    %v108 = vpack.c.bf16 %v107, %v107
    %v109 = vld [vmem:[#allocation2] sm:$0xff]
    %v110 = vld [vmem:[#allocation2 + $0x8] sm:$0xff]
    %v111 = vld [vmem:[#allocation2 + $0x10] sm:$0xff]
    %v112 = vld [vmem:[#allocation2 + $0x18] sm:$0xff]
    %v113 = vld [vmem:[#allocation2 + $0x20] sm:$0xff]
    %v114 = vld [vmem:[#allocation2 + $0x28] sm:$0xff]
    %v115 = vld [vmem:[#allocation2 + $0x30] sm:$0xff]
    %v116 = vld [vmem:[#allocation2 + $0x38] sm:$0xff]
    %v117 = vld [vmem:[#allocation2 + $0x40] sm:$0xff]
    %v118 = vld [vmem:[#allocation2 + $0x48] sm:$0xff]
    %v119 = vld [vmem:[#allocation2 + $0x50] sm:$0xff]
    %v120 = vld [vmem:[#allocation2 + $0x58] sm:$0xff]
    %v121 = vld [vmem:[#allocation2 + $0x60] sm:$0xff]
    %v122 = vld [vmem:[#allocation2 + $0x68] sm:$0xff]
    %v123 = vld [vmem:[#allocation2 + $0x70] sm:$0xff]
    %v124 = vld [vmem:[#allocation2 + $0x78] sm:$0xff]
    %v125 = vld [vmem:[#allocation2 + $0x80] sm:$0xff]
    %v126 = vld [vmem:[#allocation2 + $0x88] sm:$0xff]
    %v127 = vld [vmem:[#allocation2 + $0x90] sm:$0xff]
    %v128 = vld [vmem:[#allocation2 + $0x98] sm:$0xff]
    %v129 = vld [vmem:[#allocation2 + $0xa0] sm:$0xff]
    %v130 = vld [vmem:[#allocation2 + $0xa8] sm:$0xff]
    %v131 = vld [vmem:[#allocation2 + $0xb0] sm:$0xff]
    %v132 = vld [vmem:[#allocation2 + $0xb8] sm:$0xff]
    %v133 = vld [vmem:[#allocation2 + $0xc0] sm:$0xff]
    %v134 = vld [vmem:[#allocation2 + $0xc8] sm:$0xff]
    %v135 = vld [vmem:[#allocation2 + $0xd0] sm:$0xff]
    %v136 = vld [vmem:[#allocation2 + $0xd8] sm:$0xff]
    %v137 = vld [vmem:[#allocation2 + $0xe0] sm:$0xff]
    %v138 = vld [vmem:[#allocation2 + $0xe8] sm:$0xff]
    %v139 = vld [vmem:[#allocation2 + $0xf0] sm:$0xff]
    %v140 = vld [vmem:[#allocation2 + $0xf8] sm:$0xff]
    %v141 = vld [vmem:[#allocation10] ss:$8 sm:$0xf]
    %v143 = vlaneseq
    %v144 = vshrl.u32 %v143, 7
    %v145 = vsub.s32 0, %v144
    %v146 = vrot.slane %v141, %v145
    %v147 = vlaneseq
    %v148 = vshrl.u32 %v147, 7
    %v149 = vsub.s32 1, %v148
    %v150 = vrot.slane %v141, %v149
    %v151 = vlaneseq
    %v152 = vshrl.u32 %v151, 7
    %v153 = vsub.s32 2, %v152
    %v154 = vrot.slane %v141, %v153
    %v155 = vlaneseq
    %v156 = vshrl.u32 %v155, 7
    %v157 = vsub.s32 3, %v156
    %v158 = vrot.slane %v141, %v157
    %v195 = vunpack.c.l.b16 %v109
    %v196 = vunpack.c.h.b16 %v109
    %v197 = vunpack.c.l.b16 %v110
    %v198 = vunpack.c.h.b16 %v110
    %v199 = vunpack.c.l.b16 %v111
    %v200 = vunpack.c.h.b16 %v111
    %v201 = vunpack.c.l.b16 %v112
    %v202 = vunpack.c.h.b16 %v112
    %v203 = vunpack.c.l.b16 %v113
    %v204 = vunpack.c.h.b16 %v113
    %v205 = vunpack.c.l.b16 %v114
    %v206 = vunpack.c.h.b16 %v114
    %v207 = vunpack.c.l.b16 %v115
    %v208 = vunpack.c.h.b16 %v115
    %v209 = vunpack.c.l.b16 %v116
    %v210 = vunpack.c.h.b16 %v116
    %v211 = vunpack.c.l.b16 %v117
    %v212 = vunpack.c.h.b16 %v117
    %v213 = vunpack.c.l.b16 %v118
    %v214 = vunpack.c.h.b16 %v118
    %v215 = vunpack.c.l.b16 %v119
    %v216 = vunpack.c.h.b16 %v119
    %v217 = vunpack.c.l.b16 %v120
    %v218 = vunpack.c.h.b16 %v120
    %v219 = vunpack.c.l.b16 %v121
    %v220 = vunpack.c.h.b16 %v121
    %v221 = vunpack.c.l.b16 %v122
    %v222 = vunpack.c.h.b16 %v122
    %v223 = vunpack.c.l.b16 %v123
    %v224 = vunpack.c.h.b16 %v123
    %v225 = vunpack.c.l.b16 %v124
    %v226 = vunpack.c.h.b16 %v124
    %v227 = vunpack.c.l.b16 %v125
    %v228 = vunpack.c.h.b16 %v125
    %v229 = vunpack.c.l.b16 %v126
    %v230 = vunpack.c.h.b16 %v126
    %v231 = vunpack.c.l.b16 %v127
    %v232 = vunpack.c.h.b16 %v127
    %v233 = vunpack.c.l.b16 %v128
    %v234 = vunpack.c.h.b16 %v128
    %v235 = vunpack.c.l.b16 %v129
    %v236 = vunpack.c.h.b16 %v129
    %v237 = vunpack.c.l.b16 %v130
    %v238 = vunpack.c.h.b16 %v130
    %v239 = vunpack.c.l.b16 %v131
    %v240 = vunpack.c.h.b16 %v131
    %v241 = vunpack.c.l.b16 %v132
    %v242 = vunpack.c.h.b16 %v132
    %v243 = vunpack.c.l.b16 %v133
    %v244 = vunpack.c.h.b16 %v133
    %v245 = vunpack.c.l.b16 %v134
    %v246 = vunpack.c.h.b16 %v134
    %v247 = vunpack.c.l.b16 %v135
    %v248 = vunpack.c.h.b16 %v135
    %v249 = vunpack.c.l.b16 %v136
    %v250 = vunpack.c.h.b16 %v136
    %v251 = vunpack.c.l.b16 %v137
    %v252 = vunpack.c.h.b16 %v137
    %v253 = vunpack.c.l.b16 %v138
    %v254 = vunpack.c.h.b16 %v138
    %v255 = vunpack.c.l.b16 %v139
    %v256 = vunpack.c.h.b16 %v139
    %v257 = vunpack.c.l.b16 %v140
    %v258 = vunpack.c.h.b16 %v140
    %v259 = vpack.c.b16 %v199, %v195
    %v260 = vpack.c.b16 %v200, %v196
    %v261 = vpack.c.b16 %v201, %v197
    %v262 = vpack.c.b16 %v202, %v198
    %v263 = vpack.c.b16 %v207, %v203
    %v264 = vpack.c.b16 %v208, %v204
    %v265 = vpack.c.b16 %v209, %v205
    %v266 = vpack.c.b16 %v210, %v206
    %v267 = vpack.c.b16 %v215, %v211
    %v268 = vpack.c.b16 %v216, %v212
    %v269 = vpack.c.b16 %v217, %v213
    %v270 = vpack.c.b16 %v218, %v214
    %v271 = vpack.c.b16 %v223, %v219
    %v272 = vpack.c.b16 %v224, %v220
    %v273 = vpack.c.b16 %v225, %v221
    %v274 = vpack.c.b16 %v226, %v222
    %v275 = vpack.c.b16 %v231, %v227
    %v276 = vpack.c.b16 %v232, %v228
    %v277 = vpack.c.b16 %v233, %v229
    %v278 = vpack.c.b16 %v234, %v230
    %v279 = vpack.c.b16 %v239, %v235
    %v280 = vpack.c.b16 %v240, %v236
    %v281 = vpack.c.b16 %v241, %v237
    %v282 = vpack.c.b16 %v242, %v238
    %v283 = vpack.c.b16 %v247, %v243
    %v284 = vpack.c.b16 %v248, %v244
    %v285 = vpack.c.b16 %v249, %v245
    %v286 = vpack.c.b16 %v250, %v246
    %v287 = vpack.c.b16 %v255, %v251
    %v288 = vpack.c.b16 %v256, %v252
    %v289 = vpack.c.b16 %v257, %v253
    %v290 = vpack.c.b16 %v258, %v254
    %323 = vmatprep.subr.bf16.mxu0 %v260
    %324 = vmatpush1.bf16.msra.mxu0 %v259
    %325 = vmatprep.subr.bf16.mxu0 %v264
    %326 = vmatpush1.bf16.msra.mxu0 %v263
    %327 = vmatprep.subr.bf16.mxu0 %v268
    %328 = vmatpush1.bf16.msra.mxu0 %v267
    %329 = vmatprep.subr.bf16.mxu0 %v272
    %330 = vmatpush1.bf16.msra.mxu0 %v271
    %331 = vmatprep.subr.bf16.mxu0 %v276
    %332 = vmatpush1.bf16.msra.mxu0 %v275
    %333 = vmatprep.subr.bf16.mxu0 %v280
    %334 = vmatpush1.bf16.msra.mxu0 %v279
    %335 = vmatprep.subr.bf16.mxu0 %v284
    %336 = vmatpush1.bf16.msra.mxu0 %v283
    %337 = vmatprep.subr.bf16.mxu0 %v288
    %338 = vmatpush1.bf16.msra.mxu0 %v287
    %339 = vmatprep.subr.bf16.mxu0 0
    %340 = vmatpush1.bf16.msra.mxu0 0
    %341 = vmatprep.subr.bf16.mxu0 0
    %342 = vmatpush1.bf16.msra.mxu0 0
    %343 = vmatprep.subr.bf16.mxu0 0
    %344 = vmatpush1.bf16.msra.mxu0 0
    %345 = vmatprep.subr.bf16.mxu0 0
    %346 = vmatpush1.bf16.msra.mxu0 0
    %347 = vmatprep.subr.bf16.mxu0 0
    %348 = vmatpush1.bf16.msra.mxu0 0
    %349 = vmatprep.subr.bf16.mxu0 0
    %350 = vmatpush1.bf16.msra.mxu0 0
    %351 = vmatprep.subr.bf16.mxu0 0
    %352 = vmatpush1.bf16.msra.mxu0 0
    %353 = vmatprep.subr.bf16.mxu0 0
    %354 = vmatpush1.bf16.msra.mxu0 0
    %355 = vmatprep.mubr.bf16.mxu0 0
    %356 = vmatmul.mubr.bf16.gmra.mrb[0].mxu0 %v108
    %v357 = vpop.f32.mrb[0].mxu0
    %v358 = vadd.f32 %v146, %v357
    %v359 = vpop.f32.mrb[0].mxu0
    %v360 = vadd.f32 %v150, %v359
    %v361 = vpop.f32.mrb[0].mxu0
    %v362 = vpop.f32.mrb[0].mxu0
    %363 = vdwg.mxu0
    %364 = vmatprep.subr.bf16.mxu0 %v262
    %365 = vmatpush1.bf16.msra.mxu0 %v261
    %366 = vmatprep.subr.bf16.mxu0 %v266
    %367 = vmatpush1.bf16.msra.mxu0 %v265
    %368 = vmatprep.subr.bf16.mxu0 %v270
    %369 = vmatpush1.bf16.msra.mxu0 %v269
    %370 = vmatprep.subr.bf16.mxu0 %v274
    %371 = vmatpush1.bf16.msra.mxu0 %v273
    %372 = vmatprep.subr.bf16.mxu0 %v278
    %373 = vmatpush1.bf16.msra.mxu0 %v277
    %374 = vmatprep.subr.bf16.mxu0 %v282
    %375 = vmatpush1.bf16.msra.mxu0 %v281
    %376 = vmatprep.subr.bf16.mxu0 %v286
    %377 = vmatpush1.bf16.msra.mxu0 %v285
    %378 = vmatprep.subr.bf16.mxu0 %v290
    %379 = vmatpush1.bf16.msra.mxu0 %v289
    %380 = vmatprep.subr.bf16.mxu0 0
    %381 = vmatpush1.bf16.msra.mxu0 0
    %382 = vmatprep.subr.bf16.mxu0 0
    %383 = vmatpush1.bf16.msra.mxu0 0
    %384 = vmatprep.subr.bf16.mxu0 0
    %385 = vmatpush1.bf16.msra.mxu0 0
    %386 = vmatprep.subr.bf16.mxu0 0
    %387 = vmatpush1.bf16.msra.mxu0 0
    %388 = vmatprep.subr.bf16.mxu0 0
    %389 = vmatpush1.bf16.msra.mxu0 0
    %390 = vmatprep.subr.bf16.mxu0 0
    %391 = vmatpush1.bf16.msra.mxu0 0
    %392 = vmatprep.subr.bf16.mxu0 0
    %393 = vmatpush1.bf16.msra.mxu0 0
    %394 = vmatprep.subr.bf16.mxu0 0
    %395 = vmatpush1.bf16.msra.mxu0 0
    %396 = vmatprep.mubr.bf16.mxu0 0
    %397 = vmatmul.mubr.bf16.gmra.mrb[0].mxu0 %v108
    %v398 = vpop.f32.mrb[0].mxu0
    %v399 = vadd.f32 %v154, %v398
    %v400 = vpop.f32.mrb[0].mxu0
    %v401 = vadd.f32 %v158, %v400
    %v402 = vpop.f32.mrb[0].mxu0
    %v403 = vpop.f32.mrb[0].mxu0
    %404 = vdwg.mxu0
    %v405 = vmax.f32 %v358, 0.0
    %v406 = vmax.f32 %v360, 0.0
    %v407 = vmax.f32 %v399, 0.0
    %v408 = vmax.f32 %v401, 0.0
    %v409 = vpack.c.bf16 %v405, %v405
    %v410 = vpack.c.bf16 %v406, %v406
    %v411 = vpack.c.bf16 %v407, %v407
    %v412 = vpack.c.bf16 %v408, %v408
    %v413 = vld [vmem:[#allocation4] sm:$0xff]
    %v414 = vld [vmem:[#allocation4 + $0x8] sm:$0xff]
    %v415 = vld [vmem:[#allocation4 + $0x10] sm:$0xff]
    %v416 = vld [vmem:[#allocation4 + $0x18] sm:$0xff]
    %v417 = vld [vmem:[#allocation4 + $0x20] sm:$0xff]
    %v418 = vld [vmem:[#allocation4 + $0x28] sm:$0xff]
    %v419 = vld [vmem:[#allocation4 + $0x30] sm:$0xff]
    %v420 = vld [vmem:[#allocation4 + $0x38] sm:$0xff]
    %v421 = vld [vmem:[#allocation4 + $0x40] sm:$0xff]
    %v422 = vld [vmem:[#allocation4 + $0x48] sm:$0xff]
    %v423 = vld [vmem:[#allocation4 + $0x50] sm:$0xff]
    %v424 = vld [vmem:[#allocation4 + $0x58] sm:$0xff]
    %v425 = vld [vmem:[#allocation4 + $0x60] sm:$0xff]
    %v426 = vld [vmem:[#allocation4 + $0x68] sm:$0xff]
    %v427 = vld [vmem:[#allocation4 + $0x70] sm:$0xff]
    %v428 = vld [vmem:[#allocation4 + $0x78] sm:$0xff]
    %v429 = vld [vmem:[#allocation4 + $0x80] sm:$0xff]
    %v430 = vld [vmem:[#allocation4 + $0x88] sm:$0xff]
    %v431 = vld [vmem:[#allocation4 + $0x90] sm:$0xff]
    %v432 = vld [vmem:[#allocation4 + $0x98] sm:$0xff]
    %v433 = vld [vmem:[#allocation4 + $0xa0] sm:$0xff]
    %v434 = vld [vmem:[#allocation4 + $0xa8] sm:$0xff]
    %v435 = vld [vmem:[#allocation4 + $0xb0] sm:$0xff]
    %v436 = vld [vmem:[#allocation4 + $0xb8] sm:$0xff]
    %v437 = vld [vmem:[#allocation4 + $0xc0] sm:$0xff]
    %v438 = vld [vmem:[#allocation4 + $0xc8] sm:$0xff]
    %v439 = vld [vmem:[#allocation4 + $0xd0] sm:$0xff]
    %v440 = vld [vmem:[#allocation4 + $0xd8] sm:$0xff]
    %v441 = vld [vmem:[#allocation4 + $0xe0] sm:$0xff]
    %v442 = vld [vmem:[#allocation4 + $0xe8] sm:$0xff]
    %v443 = vld [vmem:[#allocation4 + $0xf0] sm:$0xff]
    %v444 = vld [vmem:[#allocation4 + $0xf8] sm:$0xff]
    %v445 = vld [vmem:[#allocation4 + $0x100] sm:$0xff]
    %v446 = vld [vmem:[#allocation4 + $0x108] sm:$0xff]
    %v447 = vld [vmem:[#allocation4 + $0x110] sm:$0xff]
    %v448 = vld [vmem:[#allocation4 + $0x118] sm:$0xff]
    %v449 = vld [vmem:[#allocation4 + $0x120] sm:$0xff]
    %v450 = vld [vmem:[#allocation4 + $0x128] sm:$0xff]
    %v451 = vld [vmem:[#allocation4 + $0x130] sm:$0xff]
    %v452 = vld [vmem:[#allocation4 + $0x138] sm:$0xff]
    %v453 = vld [vmem:[#allocation4 + $0x140] sm:$0xff]
    %v454 = vld [vmem:[#allocation4 + $0x148] sm:$0xff]
    %v455 = vld [vmem:[#allocation4 + $0x150] sm:$0xff]
    %v456 = vld [vmem:[#allocation4 + $0x158] sm:$0xff]
    %v457 = vld [vmem:[#allocation4 + $0x160] sm:$0xff]
    %v458 = vld [vmem:[#allocation4 + $0x168] sm:$0xff]
    %v459 = vld [vmem:[#allocation4 + $0x170] sm:$0xff]
    %v460 = vld [vmem:[#allocation4 + $0x178] sm:$0xff]
    %v461 = vld [vmem:[#allocation4 + $0x180] sm:$0xff]
    %v462 = vld [vmem:[#allocation4 + $0x188] sm:$0xff]
    %v463 = vld [vmem:[#allocation4 + $0x190] sm:$0xff]
    %v464 = vld [vmem:[#allocation4 + $0x198] sm:$0xff]
    %v465 = vld [vmem:[#allocation4 + $0x1a0] sm:$0xff]
    %v466 = vld [vmem:[#allocation4 + $0x1a8] sm:$0xff]
    %v467 = vld [vmem:[#allocation4 + $0x1b0] sm:$0xff]
    %v468 = vld [vmem:[#allocation4 + $0x1b8] sm:$0xff]
    %v469 = vld [vmem:[#allocation4 + $0x1c0] sm:$0xff]
    %v470 = vld [vmem:[#allocation4 + $0x1c8] sm:$0xff]
    %v471 = vld [vmem:[#allocation4 + $0x1d0] sm:$0xff]
    %v472 = vld [vmem:[#allocation4 + $0x1d8] sm:$0xff]
    %v473 = vld [vmem:[#allocation4 + $0x1e0] sm:$0xff]
    %v474 = vld [vmem:[#allocation4 + $0x1e8] sm:$0xff]
    %v475 = vld [vmem:[#allocation4 + $0x1f0] sm:$0xff]
    %v476 = vld [vmem:[#allocation4 + $0x1f8] sm:$0xff]
    %s477 = scalar_lea.vmem [#allocation10], 1
    %v478 = vld [vmem:[%s477] ss:$8 sm:$0x3]
    %v480 = vlaneseq
    %v481 = vshrl.u32 %v480, 7
    %v482 = vsub.s32 0, %v481
    %v483 = vrot.slane %v478, %v482
    %v484 = vlaneseq
    %v485 = vshrl.u32 %v484, 7
    %v486 = vsub.s32 1, %v485
    %v487 = vrot.slane %v478, %v486
    %v554 = vunpack.c.l.b16 %v413
    %v555 = vunpack.c.h.b16 %v413
    %v556 = vunpack.c.l.b16 %v414
    %v557 = vunpack.c.h.b16 %v414
    %v558 = vunpack.c.l.b16 %v415
    %v559 = vunpack.c.h.b16 %v415
    %v560 = vunpack.c.l.b16 %v416
    %v561 = vunpack.c.h.b16 %v416
    %v562 = vunpack.c.l.b16 %v417
    %v563 = vunpack.c.h.b16 %v417
    %v564 = vunpack.c.l.b16 %v418
    %v565 = vunpack.c.h.b16 %v418
    %v566 = vunpack.c.l.b16 %v419
    %v567 = vunpack.c.h.b16 %v419
    %v568 = vunpack.c.l.b16 %v420
    %v569 = vunpack.c.h.b16 %v420
    %v570 = vunpack.c.l.b16 %v421
    %v571 = vunpack.c.h.b16 %v421
    %v572 = vunpack.c.l.b16 %v422
    %v573 = vunpack.c.h.b16 %v422
    %v574 = vunpack.c.l.b16 %v423
    %v575 = vunpack.c.h.b16 %v423
    %v576 = vunpack.c.l.b16 %v424
    %v577 = vunpack.c.h.b16 %v424
    %v578 = vunpack.c.l.b16 %v425
    %v579 = vunpack.c.h.b16 %v425
    %v580 = vunpack.c.l.b16 %v426
    %v581 = vunpack.c.h.b16 %v426
    %v582 = vunpack.c.l.b16 %v427
    %v583 = vunpack.c.h.b16 %v427
    %v584 = vunpack.c.l.b16 %v428
    %v585 = vunpack.c.h.b16 %v428
    %v586 = vunpack.c.l.b16 %v429
    %v587 = vunpack.c.h.b16 %v429
    %v588 = vunpack.c.l.b16 %v430
    %v589 = vunpack.c.h.b16 %v430
    %v590 = vunpack.c.l.b16 %v431
    %v591 = vunpack.c.h.b16 %v431
    %v592 = vunpack.c.l.b16 %v432
    %v593 = vunpack.c.h.b16 %v432
    %v594 = vunpack.c.l.b16 %v433
    %v595 = vunpack.c.h.b16 %v433
    %v596 = vunpack.c.l.b16 %v434
    %v597 = vunpack.c.h.b16 %v434
    %v598 = vunpack.c.l.b16 %v435
    %v599 = vunpack.c.h.b16 %v435
    %v600 = vunpack.c.l.b16 %v436
    %v601 = vunpack.c.h.b16 %v436
    %v602 = vunpack.c.l.b16 %v437
    %v603 = vunpack.c.h.b16 %v437
    %v604 = vunpack.c.l.b16 %v438
    %v605 = vunpack.c.h.b16 %v438
    %v606 = vunpack.c.l.b16 %v439
    %v607 = vunpack.c.h.b16 %v439
    %v608 = vunpack.c.l.b16 %v440
    %v609 = vunpack.c.h.b16 %v440
    %v610 = vunpack.c.l.b16 %v441
    %v611 = vunpack.c.h.b16 %v441
    %v612 = vunpack.c.l.b16 %v442
    %v613 = vunpack.c.h.b16 %v442
    %v614 = vunpack.c.l.b16 %v443
    %v615 = vunpack.c.h.b16 %v443
    %v616 = vunpack.c.l.b16 %v444
    %v617 = vunpack.c.h.b16 %v444
    %v618 = vunpack.c.l.b16 %v445
    %v619 = vunpack.c.h.b16 %v445
    %v620 = vunpack.c.l.b16 %v446
    %v621 = vunpack.c.h.b16 %v446
    %v622 = vunpack.c.l.b16 %v447
    %v623 = vunpack.c.h.b16 %v447
    %v624 = vunpack.c.l.b16 %v448
    %v625 = vunpack.c.h.b16 %v448
    %v626 = vunpack.c.l.b16 %v449
    %v627 = vunpack.c.h.b16 %v449
    %v628 = vunpack.c.l.b16 %v450
    %v629 = vunpack.c.h.b16 %v450
    %v630 = vunpack.c.l.b16 %v451
    %v631 = vunpack.c.h.b16 %v451
    %v632 = vunpack.c.l.b16 %v452
    %v633 = vunpack.c.h.b16 %v452
    %v634 = vunpack.c.l.b16 %v453
    %v635 = vunpack.c.h.b16 %v453
    %v636 = vunpack.c.l.b16 %v454
    %v637 = vunpack.c.h.b16 %v454
    %v638 = vunpack.c.l.b16 %v455
    %v639 = vunpack.c.h.b16 %v455
    %v640 = vunpack.c.l.b16 %v456
    %v641 = vunpack.c.h.b16 %v456
    %v642 = vunpack.c.l.b16 %v457
    %v643 = vunpack.c.h.b16 %v457
    %v644 = vunpack.c.l.b16 %v458
    %v645 = vunpack.c.h.b16 %v458
    %v646 = vunpack.c.l.b16 %v459
    %v647 = vunpack.c.h.b16 %v459
    %v648 = vunpack.c.l.b16 %v460
    %v649 = vunpack.c.h.b16 %v460
    %v650 = vunpack.c.l.b16 %v461
    %v651 = vunpack.c.h.b16 %v461
    %v652 = vunpack.c.l.b16 %v462
    %v653 = vunpack.c.h.b16 %v462
    %v654 = vunpack.c.l.b16 %v463
    %v655 = vunpack.c.h.b16 %v463
    %v656 = vunpack.c.l.b16 %v464
    %v657 = vunpack.c.h.b16 %v464
    %v658 = vunpack.c.l.b16 %v465
    %v659 = vunpack.c.h.b16 %v465
    %v660 = vunpack.c.l.b16 %v466
    %v661 = vunpack.c.h.b16 %v466
    %v662 = vunpack.c.l.b16 %v467
    %v663 = vunpack.c.h.b16 %v467
    %v664 = vunpack.c.l.b16 %v468
    %v665 = vunpack.c.h.b16 %v468
    %v666 = vunpack.c.l.b16 %v469
    %v667 = vunpack.c.h.b16 %v469
    %v668 = vunpack.c.l.b16 %v470
    %v669 = vunpack.c.h.b16 %v470
    %v670 = vunpack.c.l.b16 %v471
    %v671 = vunpack.c.h.b16 %v471
    %v672 = vunpack.c.l.b16 %v472
    %v673 = vunpack.c.h.b16 %v472
    %v674 = vunpack.c.l.b16 %v473
    %v675 = vunpack.c.h.b16 %v473
    %v676 = vunpack.c.l.b16 %v474
    %v677 = vunpack.c.h.b16 %v474
    %v678 = vunpack.c.l.b16 %v475
    %v679 = vunpack.c.h.b16 %v475
    %v680 = vunpack.c.l.b16 %v476
    %v681 = vunpack.c.h.b16 %v476
    %v682 = vpack.c.b16 %v556, %v554
    %v683 = vpack.c.b16 %v557, %v555
    %v684 = vpack.c.b16 %v560, %v558
    %v685 = vpack.c.b16 %v561, %v559
    %v686 = vpack.c.b16 %v564, %v562
    %v687 = vpack.c.b16 %v565, %v563
    %v688 = vpack.c.b16 %v568, %v566
    %v689 = vpack.c.b16 %v569, %v567
    %v690 = vpack.c.b16 %v572, %v570
    %v691 = vpack.c.b16 %v573, %v571
    %v692 = vpack.c.b16 %v576, %v574
    %v693 = vpack.c.b16 %v577, %v575
    %v694 = vpack.c.b16 %v580, %v578
    %v695 = vpack.c.b16 %v581, %v579
    %v696 = vpack.c.b16 %v584, %v582
    %v697 = vpack.c.b16 %v585, %v583
    %v698 = vpack.c.b16 %v588, %v586
    %v699 = vpack.c.b16 %v589, %v587
    %v700 = vpack.c.b16 %v592, %v590
    %v701 = vpack.c.b16 %v593, %v591
    %v702 = vpack.c.b16 %v596, %v594
    %v703 = vpack.c.b16 %v597, %v595
    %v704 = vpack.c.b16 %v600, %v598
    %v705 = vpack.c.b16 %v601, %v599
    %v706 = vpack.c.b16 %v604, %v602
    %v707 = vpack.c.b16 %v605, %v603
    %v708 = vpack.c.b16 %v608, %v606
    %v709 = vpack.c.b16 %v609, %v607
    %v710 = vpack.c.b16 %v612, %v610
    %v711 = vpack.c.b16 %v613, %v611
    %v712 = vpack.c.b16 %v616, %v614
    %v713 = vpack.c.b16 %v617, %v615
    %v714 = vpack.c.b16 %v620, %v618
    %v715 = vpack.c.b16 %v621, %v619
    %v716 = vpack.c.b16 %v624, %v622
    %v717 = vpack.c.b16 %v625, %v623
    %v718 = vpack.c.b16 %v628, %v626
    %v719 = vpack.c.b16 %v629, %v627
    %v720 = vpack.c.b16 %v632, %v630
    %v721 = vpack.c.b16 %v633, %v631
    %v722 = vpack.c.b16 %v636, %v634
    %v723 = vpack.c.b16 %v637, %v635
    %v724 = vpack.c.b16 %v640, %v638
    %v725 = vpack.c.b16 %v641, %v639
    %v726 = vpack.c.b16 %v644, %v642
    %v727 = vpack.c.b16 %v645, %v643
    %v728 = vpack.c.b16 %v648, %v646
    %v729 = vpack.c.b16 %v649, %v647
    %v730 = vpack.c.b16 %v652, %v650
    %v731 = vpack.c.b16 %v653, %v651
    %v732 = vpack.c.b16 %v656, %v654
    %v733 = vpack.c.b16 %v657, %v655
    %v734 = vpack.c.b16 %v660, %v658
    %v735 = vpack.c.b16 %v661, %v659
    %v736 = vpack.c.b16 %v664, %v662
    %v737 = vpack.c.b16 %v665, %v663
    %v738 = vpack.c.b16 %v668, %v666
    %v739 = vpack.c.b16 %v669, %v667
    %v740 = vpack.c.b16 %v672, %v670
    %v741 = vpack.c.b16 %v673, %v671
    %v742 = vpack.c.b16 %v676, %v674
    %v743 = vpack.c.b16 %v677, %v675
    %v744 = vpack.c.b16 %v680, %v678
    %v745 = vpack.c.b16 %v681, %v679
    %810 = vmatprep.subr.bf16.mxu0 %v683
    %811 = vmatpush1.bf16.msra.mxu0 %v682
    %812 = vmatprep.subr.bf16.mxu0 %v685
    %813 = vmatpush1.bf16.msra.mxu0 %v684
    %814 = vmatprep.subr.bf16.mxu0 %v687
    %815 = vmatpush1.bf16.msra.mxu0 %v686
    %816 = vmatprep.subr.bf16.mxu0 %v689
    %817 = vmatpush1.bf16.msra.mxu0 %v688
    %818 = vmatprep.subr.bf16.mxu0 %v691
    %819 = vmatpush1.bf16.msra.mxu0 %v690
    %820 = vmatprep.subr.bf16.mxu0 %v693
    %821 = vmatpush1.bf16.msra.mxu0 %v692
    %822 = vmatprep.subr.bf16.mxu0 %v695
    %823 = vmatpush1.bf16.msra.mxu0 %v694
    %824 = vmatprep.subr.bf16.mxu0 %v697
    %825 = vmatpush1.bf16.msra.mxu0 %v696
    %826 = vmatprep.subr.bf16.mxu0 %v699
    %827 = vmatpush1.bf16.msra.mxu0 %v698
    %828 = vmatprep.subr.bf16.mxu0 %v701
    %829 = vmatpush1.bf16.msra.mxu0 %v700
    %830 = vmatprep.subr.bf16.mxu0 %v703
    %831 = vmatpush1.bf16.msra.mxu0 %v702
    %832 = vmatprep.subr.bf16.mxu0 %v705
    %833 = vmatpush1.bf16.msra.mxu0 %v704
    %834 = vmatprep.subr.bf16.mxu0 %v707
    %835 = vmatpush1.bf16.msra.mxu0 %v706
    %836 = vmatprep.subr.bf16.mxu0 %v709
    %837 = vmatpush1.bf16.msra.mxu0 %v708
    %838 = vmatprep.subr.bf16.mxu0 %v711
    %839 = vmatpush1.bf16.msra.mxu0 %v710
    %840 = vmatprep.subr.bf16.mxu0 %v713
    %841 = vmatpush1.bf16.msra.mxu0 %v712
    %842 = vmatprep.mubr.bf16.mxu0 %v410
    %843 = vmatmul.mubr.bf16.gmra.mrb[0].mxu0 %v409
    %v844 = vpop.f32.mrb[0].mxu0
    %v845 = vadd.f32 %v483, %v844
    %v846 = vpop.f32.mrb[0].mxu0
    %v847 = vadd.f32 %v487, %v846
    %v848 = vpop.f32.mrb[0].mxu0
    %v849 = vpop.f32.mrb[0].mxu0
    %850 = vdwg.mxu0
    %851 = vmatprep.subr.bf16.mxu0 %v715
    %852 = vmatpush1.bf16.msra.mxu0 %v714
    %853 = vmatprep.subr.bf16.mxu0 %v717
    %854 = vmatpush1.bf16.msra.mxu0 %v716
    %855 = vmatprep.subr.bf16.mxu0 %v719
    %856 = vmatpush1.bf16.msra.mxu0 %v718
    %857 = vmatprep.subr.bf16.mxu0 %v721
    %858 = vmatpush1.bf16.msra.mxu0 %v720
    %859 = vmatprep.subr.bf16.mxu0 %v723
    %860 = vmatpush1.bf16.msra.mxu0 %v722
    %861 = vmatprep.subr.bf16.mxu0 %v725
    %862 = vmatpush1.bf16.msra.mxu0 %v724
    %863 = vmatprep.subr.bf16.mxu0 %v727
    %864 = vmatpush1.bf16.msra.mxu0 %v726
    %865 = vmatprep.subr.bf16.mxu0 %v729
    %866 = vmatpush1.bf16.msra.mxu0 %v728
    %867 = vmatprep.subr.bf16.mxu0 %v731
    %868 = vmatpush1.bf16.msra.mxu0 %v730
    %869 = vmatprep.subr.bf16.mxu0 %v733
    %870 = vmatpush1.bf16.msra.mxu0 %v732
    %871 = vmatprep.subr.bf16.mxu0 %v735
    %872 = vmatpush1.bf16.msra.mxu0 %v734
    %873 = vmatprep.subr.bf16.mxu0 %v737
    %874 = vmatpush1.bf16.msra.mxu0 %v736
    %875 = vmatprep.subr.bf16.mxu0 %v739
    %876 = vmatpush1.bf16.msra.mxu0 %v738
    %877 = vmatprep.subr.bf16.mxu0 %v741
    %878 = vmatpush1.bf16.msra.mxu0 %v740
    %879 = vmatprep.subr.bf16.mxu0 %v743
    %880 = vmatpush1.bf16.msra.mxu0 %v742
    %881 = vmatprep.subr.bf16.mxu0 %v745
    %882 = vmatpush1.bf16.msra.mxu0 %v744
    %883 = vmatprep.mubr.bf16.mxu0 %v412
    %884 = vmatmul.mubr.bf16.gmra.mrb[0].mxu0 %v411
    %v885 = vpop.f32.mrb[0].mxu0
    %v886 = vadd.f32 %v845, %v885
    %v887 = vpop.f32.mrb[0].mxu0
    %v888 = vadd.f32 %v847, %v887
    %v889 = vpop.f32.mrb[0].mxu0
    %v890 = vpop.f32.mrb[0].mxu0
    %891 = vdwg.mxu0
    %v892 = vmax.f32 %v886, 0.0
    %v893 = vmax.f32 %v888, 0.0
    %v894 = vpack.c.bf16 %v892, %v892
    %v895 = vpack.c.bf16 %v893, %v893
    %v896 = vld [vmem:[#allocation6] sm:$0xf]
    %v897 = vld [vmem:[#allocation6 + $0x4] sm:$0xf]
    %v898 = vld [vmem:[#allocation6 + $0x8] sm:$0xf]
    %v899 = vld [vmem:[#allocation6 + $0xc] sm:$0xf]
    %v900 = vld [vmem:[#allocation6 + $0x10] sm:$0xf]
    %v901 = vld [vmem:[#allocation6 + $0x14] sm:$0xf]
    %v902 = vld [vmem:[#allocation6 + $0x18] sm:$0xf]
    %v903 = vld [vmem:[#allocation6 + $0x1c] sm:$0xf]
    %v904 = vld [vmem:[#allocation6 + $0x20] sm:$0xf]
    %v905 = vld [vmem:[#allocation6 + $0x24] sm:$0xf]
    %v906 = vld [vmem:[#allocation6 + $0x28] sm:$0xf]
    %v907 = vld [vmem:[#allocation6 + $0x2c] sm:$0xf]
    %v908 = vld [vmem:[#allocation6 + $0x30] sm:$0xf]
    %v909 = vld [vmem:[#allocation6 + $0x34] sm:$0xf]
    %v910 = vld [vmem:[#allocation6 + $0x38] sm:$0xf]
    %v911 = vld [vmem:[#allocation6 + $0x3c] sm:$0xf]
    %v912 = vld [vmem:[#allocation6 + $0x40] sm:$0xf]
    %v913 = vld [vmem:[#allocation6 + $0x44] sm:$0xf]
    %v914 = vld [vmem:[#allocation6 + $0x48] sm:$0xf]
    %v915 = vld [vmem:[#allocation6 + $0x4c] sm:$0xf]
    %v916 = vld [vmem:[#allocation6 + $0x50] sm:$0xf]
    %v917 = vld [vmem:[#allocation6 + $0x54] sm:$0xf]
    %v918 = vld [vmem:[#allocation6 + $0x58] sm:$0xf]
    %v919 = vld [vmem:[#allocation6 + $0x5c] sm:$0xf]
    %v920 = vld [vmem:[#allocation6 + $0x60] sm:$0xf]
    %v921 = vld [vmem:[#allocation6 + $0x64] sm:$0xf]
    %v922 = vld [vmem:[#allocation6 + $0x68] sm:$0xf]
    %v923 = vld [vmem:[#allocation6 + $0x6c] sm:$0xf]
    %v924 = vld [vmem:[#allocation6 + $0x70] sm:$0xf]
    %v925 = vld [vmem:[#allocation6 + $0x74] sm:$0xf]
    %v926 = vld [vmem:[#allocation6 + $0x78] sm:$0xf]
    %v927 = vld [vmem:[#allocation6 + $0x7c] sm:$0xf]
    %v928 = vld [vmem:[#allocation10 + $0x2] ss:$0 sm:$0xff]
    %v961 = vunpack.c.l.b16 %v896
    %v962 = vunpack.c.l.b16 %v897
    %v963 = vunpack.c.l.b16 %v898
    %v964 = vunpack.c.l.b16 %v899
    %v965 = vunpack.c.l.b16 %v900
    %v966 = vunpack.c.l.b16 %v901
    %v967 = vunpack.c.l.b16 %v902
    %v968 = vunpack.c.l.b16 %v903
    %v969 = vunpack.c.l.b16 %v904
    %v970 = vunpack.c.l.b16 %v905
    %v971 = vunpack.c.l.b16 %v906
    %v972 = vunpack.c.l.b16 %v907
    %v973 = vunpack.c.l.b16 %v908
    %v974 = vunpack.c.l.b16 %v909
    %v975 = vunpack.c.l.b16 %v910
    %v976 = vunpack.c.l.b16 %v911
    %v977 = vunpack.c.l.b16 %v912
    %v978 = vunpack.c.l.b16 %v913
    %v979 = vunpack.c.l.b16 %v914
    %v980 = vunpack.c.l.b16 %v915
    %v981 = vunpack.c.l.b16 %v916
    %v982 = vunpack.c.l.b16 %v917
    %v983 = vunpack.c.l.b16 %v918
    %v984 = vunpack.c.l.b16 %v919
    %v985 = vunpack.c.l.b16 %v920
    %v986 = vunpack.c.l.b16 %v921
    %v987 = vunpack.c.l.b16 %v922
    %v988 = vunpack.c.l.b16 %v923
    %v989 = vunpack.c.l.b16 %v924
    %v990 = vunpack.c.l.b16 %v925
    %v991 = vunpack.c.l.b16 %v926
    %v992 = vunpack.c.l.b16 %v927
    %v993 = vpack.c.b16 %v962, %v961
    %v994 = vpack.c.b16 %v964, %v963
    %v995 = vpack.c.b16 %v966, %v965
    %v996 = vpack.c.b16 %v968, %v967
    %v997 = vpack.c.b16 %v970, %v969
    %v998 = vpack.c.b16 %v972, %v971
    %v999 = vpack.c.b16 %v974, %v973
    %v1000 = vpack.c.b16 %v976, %v975
    %v1001 = vpack.c.b16 %v978, %v977
    %v1002 = vpack.c.b16 %v980, %v979
    %v1003 = vpack.c.b16 %v982, %v981
    %v1004 = vpack.c.b16 %v984, %v983
    %v1005 = vpack.c.b16 %v986, %v985
    %v1006 = vpack.c.b16 %v988, %v987
    %v1007 = vpack.c.b16 %v990, %v989
    %v1008 = vpack.c.b16 %v992, %v991
    %1025 = vmatprep.subr.bf16.mxu0 0
    %1026 = vmatpush1.bf16.msra.mxu0 %v993
    %1027 = vmatprep.subr.bf16.mxu0 0
    %1028 = vmatpush1.bf16.msra.mxu0 %v994
    %1029 = vmatprep.subr.bf16.mxu0 0
    %1030 = vmatpush1.bf16.msra.mxu0 %v995
    %1031 = vmatprep.subr.bf16.mxu0 0
    %1032 = vmatpush1.bf16.msra.mxu0 %v996
    %1033 = vmatprep.subr.bf16.mxu0 0
    %1034 = vmatpush1.bf16.msra.mxu0 %v997
    %1035 = vmatprep.subr.bf16.mxu0 0
    %1036 = vmatpush1.bf16.msra.mxu0 %v998
    %1037 = vmatprep.subr.bf16.mxu0 0
    %1038 = vmatpush1.bf16.msra.mxu0 %v999
    %1039 = vmatprep.subr.bf16.mxu0 0
    %1040 = vmatpush1.bf16.msra.mxu0 %v1000
    %1041 = vmatprep.subr.bf16.mxu0 0
    %1042 = vmatpush1.bf16.msra.mxu0 %v1001
    %1043 = vmatprep.subr.bf16.mxu0 0
    %1044 = vmatpush1.bf16.msra.mxu0 %v1002
    %1045 = vmatprep.subr.bf16.mxu0 0
    %1046 = vmatpush1.bf16.msra.mxu0 %v1003
    %1047 = vmatprep.subr.bf16.mxu0 0
    %1048 = vmatpush1.bf16.msra.mxu0 %v1004
    %1049 = vmatprep.subr.bf16.mxu0 0
    %1050 = vmatpush1.bf16.msra.mxu0 %v1005
    %1051 = vmatprep.subr.bf16.mxu0 0
    %1052 = vmatpush1.bf16.msra.mxu0 %v1006
    %1053 = vmatprep.subr.bf16.mxu0 0
    %1054 = vmatpush1.bf16.msra.mxu0 %v1007
    %1055 = vmatprep.subr.bf16.mxu0 0
    %1056 = vmatpush1.bf16.msra.mxu0 %v1008
    %1057 = vmatprep.mubr.bf16.mxu0 %v895
    %1058 = vmatmul.mubr.bf16.gmra.mrb[0].mxu0 %v894
    %v1059 = vpop.f32.mrb[0].mxu0
    %v1060 = vadd.f32 %v928, %v1059
    %v1061 = vpop.f32.mrb[0].mxu0
    %v1062 = vpop.f32.mrb[0].mxu0
    %v1063 = vpop.f32.mrb[0].mxu0
    %1064 = vdwg.mxu0
    %v1065 = vmax.f32 %v1060, 0.0
    %v1066 = vpack.c.bf16 %v1065, %v1065
    %v1067 = vld [vmem:[#allocation7] sm:$0xff]
    %v1068 = vld [vmem:[#allocation7 + $0x8] sm:$0xff]
    %v1069 = vld [vmem:[#allocation7 + $0x10] sm:$0xff]
    %v1070 = vld [vmem:[#allocation7 + $0x18] sm:$0xff]
    %v1071 = vld [vmem:[#allocation7 + $0x20] sm:$0xff]
    %v1072 = vld [vmem:[#allocation7 + $0x28] sm:$0xff]
    %v1073 = vld [vmem:[#allocation7 + $0x30] sm:$0xff]
    %v1074 = vld [vmem:[#allocation7 + $0x38] sm:$0xff]
    %v1075 = vld [vmem:[#allocation7 + $0x40] sm:$0xff]
    %v1076 = vld [vmem:[#allocation7 + $0x48] sm:$0xff]
    %v1077 = vld [vmem:[#allocation7 + $0x50] sm:$0xff]
    %v1078 = vld [vmem:[#allocation7 + $0x58] sm:$0xff]
    %v1079 = vld [vmem:[#allocation7 + $0x60] sm:$0xff]
    %v1080 = vld [vmem:[#allocation7 + $0x68] sm:$0xff]
    %v1081 = vld [vmem:[#allocation7 + $0x70] sm:$0xff]
    %v1082 = vld [vmem:[#allocation7 + $0x78] sm:$0xff]
    %s1083 = scalar_lea.vmem [#allocation10], 3
    %v1084 = vld [vmem:[%s1083] ss:$8 sm:$0x3]
    %v1086 = vlaneseq
    %v1087 = vshrl.u32 %v1086, 7
    %v1088 = vsub.s32 0, %v1087
    %v1089 = vrot.slane %v1084, %v1088
    %v1090 = vlaneseq
    %v1091 = vshrl.u32 %v1090, 7
    %v1092 = vsub.s32 1, %v1091
    %v1093 = vrot.slane %v1084, %v1092
    %v1112 = vunpack.c.l.b16 %v1067
    %v1113 = vunpack.c.h.b16 %v1067
    %v1114 = vunpack.c.l.b16 %v1068
    %v1115 = vunpack.c.h.b16 %v1068
    %v1116 = vunpack.c.l.b16 %v1069
    %v1117 = vunpack.c.h.b16 %v1069
    %v1118 = vunpack.c.l.b16 %v1070
    %v1119 = vunpack.c.h.b16 %v1070
    %v1120 = vunpack.c.l.b16 %v1071
    %v1121 = vunpack.c.h.b16 %v1071
    %v1122 = vunpack.c.l.b16 %v1072
    %v1123 = vunpack.c.h.b16 %v1072
    %v1124 = vunpack.c.l.b16 %v1073
    %v1125 = vunpack.c.h.b16 %v1073
    %v1126 = vunpack.c.l.b16 %v1074
    %v1127 = vunpack.c.h.b16 %v1074
    %v1128 = vunpack.c.l.b16 %v1075
    %v1129 = vunpack.c.h.b16 %v1075
    %v1130 = vunpack.c.l.b16 %v1076
    %v1131 = vunpack.c.h.b16 %v1076
    %v1132 = vunpack.c.l.b16 %v1077
    %v1133 = vunpack.c.h.b16 %v1077
    %v1134 = vunpack.c.l.b16 %v1078
    %v1135 = vunpack.c.h.b16 %v1078
    %v1136 = vunpack.c.l.b16 %v1079
    %v1137 = vunpack.c.h.b16 %v1079
    %v1138 = vunpack.c.l.b16 %v1080
    %v1139 = vunpack.c.h.b16 %v1080
    %v1140 = vunpack.c.l.b16 %v1081
    %v1141 = vunpack.c.h.b16 %v1081
    %v1142 = vunpack.c.l.b16 %v1082
    %v1143 = vunpack.c.h.b16 %v1082
    %v1144 = vpack.c.b16 %v1114, %v1112
    %v1145 = vpack.c.b16 %v1115, %v1113
    %v1146 = vpack.c.b16 %v1118, %v1116
    %v1147 = vpack.c.b16 %v1119, %v1117
    %v1148 = vpack.c.b16 %v1122, %v1120
    %v1149 = vpack.c.b16 %v1123, %v1121
    %v1150 = vpack.c.b16 %v1126, %v1124
    %v1151 = vpack.c.b16 %v1127, %v1125
    %v1152 = vpack.c.b16 %v1130, %v1128
    %v1153 = vpack.c.b16 %v1131, %v1129
    %v1154 = vpack.c.b16 %v1134, %v1132
    %v1155 = vpack.c.b16 %v1135, %v1133
    %v1156 = vpack.c.b16 %v1138, %v1136
    %v1157 = vpack.c.b16 %v1139, %v1137
    %v1158 = vpack.c.b16 %v1142, %v1140
    %v1159 = vpack.c.b16 %v1143, %v1141
    %1176 = vmatprep.subr.bf16.mxu0 %v1145
    %1177 = vmatpush1.bf16.msra.mxu0 %v1144
    %1178 = vmatprep.subr.bf16.mxu0 %v1147
    %1179 = vmatpush1.bf16.msra.mxu0 %v1146
    %1180 = vmatprep.subr.bf16.mxu0 %v1149
    %1181 = vmatpush1.bf16.msra.mxu0 %v1148
    %1182 = vmatprep.subr.bf16.mxu0 %v1151
    %1183 = vmatpush1.bf16.msra.mxu0 %v1150
    %1184 = vmatprep.subr.bf16.mxu0 %v1153
    %1185 = vmatpush1.bf16.msra.mxu0 %v1152
    %1186 = vmatprep.subr.bf16.mxu0 %v1155
    %1187 = vmatpush1.bf16.msra.mxu0 %v1154
    %1188 = vmatprep.subr.bf16.mxu0 %v1157
    %1189 = vmatpush1.bf16.msra.mxu0 %v1156
    %1190 = vmatprep.subr.bf16.mxu0 %v1159
    %1191 = vmatpush1.bf16.msra.mxu0 %v1158
    %1192 = vmatprep.subr.bf16.mxu0 0
    %1193 = vmatpush1.bf16.msra.mxu0 0
    %1194 = vmatprep.subr.bf16.mxu0 0
    %1195 = vmatpush1.bf16.msra.mxu0 0
    %1196 = vmatprep.subr.bf16.mxu0 0
    %1197 = vmatpush1.bf16.msra.mxu0 0
    %1198 = vmatprep.subr.bf16.mxu0 0
    %1199 = vmatpush1.bf16.msra.mxu0 0
    %1200 = vmatprep.subr.bf16.mxu0 0
    %1201 = vmatpush1.bf16.msra.mxu0 0
    %1202 = vmatprep.subr.bf16.mxu0 0
    %1203 = vmatpush1.bf16.msra.mxu0 0
    %1204 = vmatprep.subr.bf16.mxu0 0
    %1205 = vmatpush1.bf16.msra.mxu0 0
    %1206 = vmatprep.subr.bf16.mxu0 0
    %1207 = vmatpush1.bf16.msra.mxu0 0
    %1208 = vmatprep.mubr.bf16.mxu0 0
    %1209 = vmatmul.mubr.bf16.gmra.mrb[0].mxu0 %v1066
    %v1210 = vpop.f32.mrb[0].mxu0
    %v1211 = vadd.f32 %v1089, %v1210
    %v1212 = vpop.f32.mrb[0].mxu0
    %v1213 = vadd.f32 %v1093, %v1212
    %v1214 = vpop.f32.mrb[0].mxu0
    %v1215 = vpop.f32.mrb[0].mxu0
    %1216 = vdwg.mxu0
    %v1217 = vmax.f32 %v1211, 0.0
    %v1218 = vmax.f32 %v1213, 0.0
    %v1219 = vpack.c.bf16 %v1217, %v1217
    %v1220 = vpack.c.bf16 %v1218, %v1218
    %v1221 = vld [vmem:[#allocation9] sm:$0xf]
    %v1222 = vld [vmem:[#allocation9 + $0x4] sm:$0xf]
    %v1223 = vld [vmem:[#allocation9 + $0x8] sm:$0xf]
    %v1224 = vld [vmem:[#allocation9 + $0xc] sm:$0xf]
    %v1225 = vld [vmem:[#allocation9 + $0x10] sm:$0xf]
    %v1226 = vld [vmem:[#allocation9 + $0x14] sm:$0xf]
    %v1227 = vld [vmem:[#allocation9 + $0x18] sm:$0xf]
    %v1228 = vld [vmem:[#allocation9 + $0x1c] sm:$0xf]
    %v1229 = vld [vmem:[#allocation9 + $0x20] sm:$0xf]
    %v1230 = vld [vmem:[#allocation9 + $0x24] sm:$0xf]
    %v1231 = vld [vmem:[#allocation9 + $0x28] sm:$0xf]
    %v1232 = vld [vmem:[#allocation9 + $0x2c] sm:$0xf]
    %v1233 = vld [vmem:[#allocation9 + $0x30] sm:$0xf]
    %v1234 = vld [vmem:[#allocation9 + $0x34] sm:$0xf]
    %v1235 = vld [vmem:[#allocation9 + $0x38] sm:$0xf]
    %v1236 = vld [vmem:[#allocation9 + $0x3c] sm:$0xf]
    %v1237 = vld [vmem:[#allocation9 + $0x40] sm:$0xf]
    %v1238 = vld [vmem:[#allocation9 + $0x44] sm:$0xf]
    %v1239 = vld [vmem:[#allocation9 + $0x48] sm:$0xf]
    %v1240 = vld [vmem:[#allocation9 + $0x4c] sm:$0xf]
    %v1241 = vld [vmem:[#allocation9 + $0x50] sm:$0xf]
    %v1242 = vld [vmem:[#allocation9 + $0x54] sm:$0xf]
    %v1243 = vld [vmem:[#allocation9 + $0x58] sm:$0xf]
    %v1244 = vld [vmem:[#allocation9 + $0x5c] sm:$0xf]
    %v1245 = vld [vmem:[#allocation9 + $0x60] sm:$0xf]
    %v1246 = vld [vmem:[#allocation9 + $0x64] sm:$0xf]
    %v1247 = vld [vmem:[#allocation9 + $0x68] sm:$0xf]
    %v1248 = vld [vmem:[#allocation9 + $0x6c] sm:$0xf]
    %v1249 = vld [vmem:[#allocation9 + $0x70] sm:$0xf]
    %v1250 = vld [vmem:[#allocation9 + $0x74] sm:$0xf]
    %v1251 = vld [vmem:[#allocation9 + $0x78] sm:$0xf]
    %v1252 = vld [vmem:[#allocation9 + $0x7c] sm:$0xf]
    %v1253 = vld [vmem:[#allocation10 + $0x4] ss:$0 sm:$0xff]
    %v1286 = vunpack.c.l.b16 %v1221
    %v1287 = vunpack.c.l.b16 %v1222
    %v1288 = vunpack.c.l.b16 %v1223
    %v1289 = vunpack.c.l.b16 %v1224
    %v1290 = vunpack.c.l.b16 %v1225
    %v1291 = vunpack.c.l.b16 %v1226
    %v1292 = vunpack.c.l.b16 %v1227
    %v1293 = vunpack.c.l.b16 %v1228
    %v1294 = vunpack.c.l.b16 %v1229
    %v1295 = vunpack.c.l.b16 %v1230
    %v1296 = vunpack.c.l.b16 %v1231
    %v1297 = vunpack.c.l.b16 %v1232
    %v1298 = vunpack.c.l.b16 %v1233
    %v1299 = vunpack.c.l.b16 %v1234
    %v1300 = vunpack.c.l.b16 %v1235
    %v1301 = vunpack.c.l.b16 %v1236
    %v1302 = vunpack.c.l.b16 %v1237
    %v1303 = vunpack.c.l.b16 %v1238
    %v1304 = vunpack.c.l.b16 %v1239
    %v1305 = vunpack.c.l.b16 %v1240
    %v1306 = vunpack.c.l.b16 %v1241
    %v1307 = vunpack.c.l.b16 %v1242
    %v1308 = vunpack.c.l.b16 %v1243
    %v1309 = vunpack.c.l.b16 %v1244
    %v1310 = vunpack.c.l.b16 %v1245
    %v1311 = vunpack.c.l.b16 %v1246
    %v1312 = vunpack.c.l.b16 %v1247
    %v1313 = vunpack.c.l.b16 %v1248
    %v1314 = vunpack.c.l.b16 %v1249
    %v1315 = vunpack.c.l.b16 %v1250
    %v1316 = vunpack.c.l.b16 %v1251
    %v1317 = vunpack.c.l.b16 %v1252
    %v1318 = vpack.c.b16 %v1287, %v1286
    %v1319 = vpack.c.b16 %v1289, %v1288
    %v1320 = vpack.c.b16 %v1291, %v1290
    %v1321 = vpack.c.b16 %v1293, %v1292
    %v1322 = vpack.c.b16 %v1295, %v1294
    %v1323 = vpack.c.b16 %v1297, %v1296
    %v1324 = vpack.c.b16 %v1299, %v1298
    %v1325 = vpack.c.b16 %v1301, %v1300
    %v1326 = vpack.c.b16 %v1303, %v1302
    %v1327 = vpack.c.b16 %v1305, %v1304
    %v1328 = vpack.c.b16 %v1307, %v1306
    %v1329 = vpack.c.b16 %v1309, %v1308
    %v1330 = vpack.c.b16 %v1311, %v1310
    %v1331 = vpack.c.b16 %v1313, %v1312
    %v1332 = vpack.c.b16 %v1315, %v1314
    %v1333 = vpack.c.b16 %v1317, %v1316
    %1350 = vmatprep.subr.bf16.mxu0 0
    %1351 = vmatpush1.bf16.msra.mxu0 %v1318
    %1352 = vmatprep.subr.bf16.mxu0 0
    %1353 = vmatpush1.bf16.msra.mxu0 %v1319
    %1354 = vmatprep.subr.bf16.mxu0 0
    %1355 = vmatpush1.bf16.msra.mxu0 %v1320
    %1356 = vmatprep.subr.bf16.mxu0 0
    %1357 = vmatpush1.bf16.msra.mxu0 %v1321
    %1358 = vmatprep.subr.bf16.mxu0 0
    %1359 = vmatpush1.bf16.msra.mxu0 %v1322
    %1360 = vmatprep.subr.bf16.mxu0 0
    %1361 = vmatpush1.bf16.msra.mxu0 %v1323
    %1362 = vmatprep.subr.bf16.mxu0 0
    %1363 = vmatpush1.bf16.msra.mxu0 %v1324
    %1364 = vmatprep.subr.bf16.mxu0 0
    %1365 = vmatpush1.bf16.msra.mxu0 %v1325
    %1366 = vmatprep.subr.bf16.mxu0 0
    %1367 = vmatpush1.bf16.msra.mxu0 %v1326
    %1368 = vmatprep.subr.bf16.mxu0 0
    %1369 = vmatpush1.bf16.msra.mxu0 %v1327
    %1370 = vmatprep.subr.bf16.mxu0 0
    %1371 = vmatpush1.bf16.msra.mxu0 %v1328
    %1372 = vmatprep.subr.bf16.mxu0 0
    %1373 = vmatpush1.bf16.msra.mxu0 %v1329
    %1374 = vmatprep.subr.bf16.mxu0 0
    %1375 = vmatpush1.bf16.msra.mxu0 %v1330
    %1376 = vmatprep.subr.bf16.mxu0 0
    %1377 = vmatpush1.bf16.msra.mxu0 %v1331
    %1378 = vmatprep.subr.bf16.mxu0 0
    %1379 = vmatpush1.bf16.msra.mxu0 %v1332
    %1380 = vmatprep.subr.bf16.mxu0 0
    %1381 = vmatpush1.bf16.msra.mxu0 %v1333
    %1382 = vmatprep.mubr.bf16.mxu0 %v1220
    %1383 = vmatmul.mubr.bf16.gmra.mrb[0].mxu0 %v1219
    %v1384 = vpop.f32.mrb[0].mxu0
    %v1385 = vadd.f32 %v1253, %v1384
    %v1386 = vpop.f32.mrb[0].mxu0
    %v1387 = vpop.f32.mrb[0].mxu0
    %v1388 = vpop.f32.mrb[0].mxu0
    %1389 = vdwg.mxu0
    %v1390 = vtanh.pop %v1385
    %1391 = vst [vmem:[%s7] sm:$0xff] %v1390
    // Predicated region
    $region54: #{forward.1} parent=1 // pred_check
      _
    $region55: #{forward.1} parent=1 // pred_check_branch
      %1393 = sbr.rel (0) target = $region57
    $region56: #{forward.1} parent=1 // pred_region
      _
    $region57: #{forward.1} parent=1 // pred_fallthru
      _
    // Predicated region
    $region58: #{forward.1} parent=1 // pred_check
      _
    $region59: #{forward.1} parent=1 // pred_check_branch
      %1395 = sbr.rel (0) target = $region61
    $region60: #{forward.1} parent=1 // pred_region
      _
    $region61: #{forward.1} parent=1 // pred_fallthru
      _
    %1396 = vsyncpa [#allocation3], 1
    %1397 = vsyncpa [#allocation5], 1
    %1398 = vsyncpa [#allocation8], 1
    %1399 = vsyncpa [#allocation11], 1

</llo_original>
